<compile_context>
chip_gen: v5e
topology: v5e:2x2
jax: 0.10.0
libtpu: 0.0.40
codegen_flags: <defaults>
</compile_context>

<pallas_src>
import numpy as np
import jax
import jax.numpy as jnp
from jax.experimental import pallas as pl
from jax.experimental.pallas import tpu as pltpu

# Loss weights from MultiTaskLoss.__init__ defaults (adversarial_weight unused in forward).
RECON_W = 1.0
CLS_W = 1.0
CONSISTENCY_W = 0.1
TEMPORAL_W = 0.1
SPECTRAL_W = 0.05

_NUM_CORES = 2        # leading "parallel" grid axis (2 TCs on v7x; harmless loop elsewhere)
_MAX_TILE_ROWS = 512  # rows of the flattened (N, L) processed per grid step

# Partial-sum slots (sublane index of the (cores, 8, 128) output block).
_SQ, _ABS, _HUB, _CONS, _TEMP, _SPEC, _MASK, _CE = range(8)


def _multitask_partial_kernel(pred_ref, targ_ref, mask_ref, logits_ref, labels_ref,
                              basis_ref, out_ref):
    c = pl.program_id(0)   # core split (parallel)
    t = pl.program_id(1)   # row tiles (arbitrary / reduction)

    # Initialize this core's resident accumulator block on its first reduction step.
    @pl.when(t == 0)
    def _init():
        out_ref[...] = jnp.zeros_like(out_ref)

    pred = pred_ref[...].astype(jnp.float32)       # (R, L)
    targ = targ_ref[...].astype(jnp.float32)       # (R, L)
    mask = mask_ref[...].astype(jnp.float32)       # (R, 1)
    m2 = mask * mask
    L = pred.shape[-1]

    diff = pred - targ
    sq = diff * diff
    absd = jnp.abs(diff)
    huber = jnp.where(absd < 1.0, 0.5 * sq, absd - 0.5)   # SmoothL1, beta=1.0

    # Per-row (lane-axis) reductions first, then cheap (R,1) mask multiplies.
    sq_sum = jnp.sum(jnp.sum(sq, axis=-1, keepdims=True) * mask)
    abs_sum = jnp.sum(jnp.sum(absd, axis=-1, keepdims=True) * mask)
    hub_sum = jnp.sum(jnp.sum(huber, axis=-1, keepdims=True) * mask)
    mask_sum = jnp.sum(mask)

    # Consistency: first differences of diff == pred_diff - targ_diff.
    # Reference computes sum(((pred_diff - targ_diff) * mask)^2) -> use mask^2 (exact for any
    # float mask, not just binary).
    cd = diff[:, 1:] - diff[:, :-1]
    cons_sum = jnp.sum(jnp.sum(cd * cd, axis=-1, keepdims=True) * m2)

    # Temporal smoothness: second differences of pred, loss*mask (as in reference).
    sd = pred[:, 2:] - 2.0 * pred[:, 1:-1] + pred[:, :-2]
    temp_sum = jnp.sum(jnp.sum(sd * sd, axis=-1, keepdims=True) * mask)

    # Spectral loss: real-input DFT via one fused [cos | -sin] basis matmul per signal.
    # |FFT|^2 is sign-invariant; bins 1..ceil(L/2)-1 weighted 2x (conjugate symmetry).
    basis = basis_ref[...]                          # (L, 2*Kf) f32
    Kf = basis.shape[-1] // 2
    pft = jnp.dot(pred, basis, preferred_element_type=jnp.float32)   # (R, 2*Kf)
    tft = jnp.dot(targ, basis, preferred_element_type=jnp.float32)
    p_psd = pft[:, :Kf] * pft[:, :Kf] + pft[:, Kf:] * pft[:, Kf:]
    t_psd = tft[:, :Kf] * tft[:, :Kf] + tft[:, Kf:] * tft[:, Kf:]
    dpsd = p_psd - t_psd
    col = jax.lax.broadcasted_iota(jnp.int32, (1, Kf), 1)
    w = jnp.where(col == 0, 1.0, 2.0)
    if L % 2 == 0:
        w = jnp.where(col == Kf - 1, 1.0, w)        # Nyquist bin appears once
    spec_sum = jnp.sum(jnp.sum(w * dpsd * dpsd, axis=-1, keepdims=True) * m2)

    # Scatter the seven per-tile sums into sublanes 0..6 and accumulate.
    sub = jax.lax.broadcasted_iota(jnp.int32, out_ref.shape, 1)      # (1, 8, 128)
    upd = jnp.zeros(out_ref.shape, jnp.float32)
    for slot, val in ((_SQ, sq_sum), (_ABS, abs_sum), (_HUB, hub_sum),
                      (_CONS, cons_sum), (_TEMP, temp_sum), (_SPEC, spec_sum),
                      (_MASK, mask_sum)):
        upd = jnp.where(sub == slot, val, upd)
    out_ref[...] += upd

    # Cross-entropy (sum over batch) computed once, on core 0 / step 0 only.
    @pl.when(jnp.logical_and(c == 0, t == 0))
    def _ce():
        logits = logits_ref[...].astype(jnp.float32)   # (B, K)
        labels = labels_ref[...]                        # (B, 1) int32
        row_max = jnp.max(logits, axis=-1, keepdims=True)
        lse = row_max + jnp.log(jnp.sum(jnp.exp(logits - row_max), axis=-1, keepdims=True))
        onehot = jax.lax.broadcasted_iota(jnp.int32, logits.shape, 1) == labels
        picked = jnp.sum(jnp.where(onehot, logits, 0.0), axis=-1, keepdims=True)
        ce_sum = jnp.sum(lse - picked)
        out_ref[...] += jnp.where(sub == _CE, ce_sum, 0.0)


@jax.jit
def multitask_loss(predictions, targets, logits, labels, real_mask):
    """predictions/targets: (B, C, L); logits: (B, K); labels: (B,) int; real_mask: (B, C)."""
    B, C, L = predictions.shape
    K = logits.shape[-1]
    N = B * C

    # Row tiling: split rows across cores, tile each core's share, pad with zero-mask rows.
    rows_per_core = -(-N // _NUM_CORES)
    tile_rows = min(_MAX_TILE_ROWS, -(-rows_per_core // 8) * 8)
    n_tiles = -(-rows_per_core // tile_rows)
    padded_N = _NUM_CORES * n_tiles * tile_rows

    pred2d = predictions.reshape(N, L)
    targ2d = targets.reshape(N, L)
    mask2d = real_mask.reshape(N, 1)
    pad = padded_N - N
    if pad:
        pred2d = jnp.pad(pred2d, ((0, pad), (0, 0)))
        targ2d = jnp.pad(targ2d, ((0, pad), (0, 0)))
        mask2d = jnp.pad(mask2d, ((0, pad), (0, 0)))
    labels2d = labels.reshape(B, 1).astype(jnp.int32)

    # rfft basis as a trace-time numpy constant: [cos | -sin], Kf = L//2 + 1 columns each.
    Kf = L // 2 + 1
    nn = np.arange(L, dtype=np.float64)
    kk = np.arange(Kf, dtype=np.float64)
    ang = 2.0 * np.pi * np.outer(nn, kk) / float(L)
    basis = jnp.asarray(np.concatenate([np.cos(ang), -np.sin(ang)], axis=1),
                        dtype=jnp.float32)          # (L, 2*Kf)

    row_map = lambda c, t: (c * n_tiles + t, 0)
    const_map = lambda c, t: (0, 0)

    out = pl.pallas_call(
        _multitask_partial_kernel,
        out_shape=jax.ShapeDtypeStruct((_NUM_CORES, 8, 128), jnp.float32),
        grid_spec=pltpu.PrefetchScalarGridSpec(
            num_scalar_prefetch=0,
            grid=(_NUM_CORES, n_tiles),
            in_specs=[
                pl.BlockSpec((tile_rows, L), row_map),       # predictions
                pl.BlockSpec((tile_rows, L), row_map),       # targets
                pl.BlockSpec((tile_rows, 1), row_map),       # mask
                pl.BlockSpec((B, K), const_map),             # logits (resident)
                pl.BlockSpec((B, 1), const_map),             # labels (resident)
                pl.BlockSpec((L, 2 * Kf), const_map),        # DFT basis (resident)
            ],
            out_specs=pl.BlockSpec((1, 8, 128), lambda c, t: (c, 0, 0)),
        ),
        compiler_params=pltpu.CompilerParams(
            dimension_semantics=("parallel", "arbitrary"),
            vmem_limit_bytes=48 * 1024 * 1024,   # above 16/32 MiB defaults, headroom on v7x
        ),
    )(pred2d, targ2d, mask2d, logits, labels2d, basis)

    part = jnp.sum(out[:, :, 0], axis=0)   # (8,) combined partial sums across cores

    denom = part[_MASK] * float(L)          # reference has no epsilon for reconstruction
    mse_loss = part[_SQ] / denom
    l1_loss = part[_ABS] / denom
    huber_loss = part[_HUB] / denom
    recon_loss = 0.5 * mse_loss + 0.3 * l1_loss + 0.2 * huber_loss
    cls_loss = part[_CE] / float(B)
    consistency_loss = part[_CONS] / (part[_MASK] * float(L - 1) + 1e-8)
    temporal_loss = part[_TEMP] / (part[_MASK] * float(L - 2) + 1e-8)
    spectral_loss = part[_SPEC] / (part[_MASK] * float(L) + 1e-8)

    total = (RECON_W * recon_loss + CLS_W * cls_loss
             + CONSISTENCY_W * consistency_loss
             + TEMPORAL_W * temporal_loss
             + SPECTRAL_W * spectral_loss)

    return {
        'total_loss': total,
        'reconstruction_loss': recon_loss,
        'mse_loss': mse_loss,
        'l1_loss': l1_loss,
        'huber_loss': huber_loss,
        'classification_loss': cls_loss,
        'consistency_loss': consistency_loss,
        'temporal_loss': temporal_loss,
        'spectral_loss': spectral_loss,
    }


if __name__ == "__main__":
    key = jax.random.PRNGKey(0)
    kp, kt, kl, ky, km = jax.random.split(key, 5)

    B, C, L, K = 2, 4, 16, 5
    predictions = jax.random.normal(kp, (B, C, L), dtype=jnp.float32)
    targets = jax.random.normal(kt, (B, C, L), dtype=jnp.float32)
    logits = jax.random.normal(kl, (B, K), dtype=jnp.float32)
    labels = jax.random.randint(ky, (B,), 0, K, dtype=jnp.int32)
    real_mask = (jax.random.uniform(km, (B, C)) > 0.3).astype(jnp.float32)
    real_mask = real_mask.at[0, 0].set(1.0)  # guarantee non-empty mask

    loss_dict = multitask_loss(predictions, targets, logits, labels, real_mask)
    jax.block_until_ready(loss_dict)
    print("KERNEL_OK")
</pallas_src>

<mosaic_0001>
module attributes {stable_mosaic.version = 11 : i64} {
  func.func @_multitask_partial_kernel(%arg0: i32, %arg1: i32, %arg2: memref<8x16xf32, #tpu.memory_space<vmem>>, %arg3: memref<8x16xf32, #tpu.memory_space<vmem>>, %arg4: memref<8x1xf32, #tpu.memory_space<vmem>>, %arg5: memref<2x5xf32, #tpu.memory_space<vmem>>, %arg6: memref<2x1xi32, #tpu.memory_space<vmem>>, %arg7: memref<16x18xf32, #tpu.memory_space<vmem>>, %arg8: memref<1x8x128xf32, #tpu.memory_space<vmem>>) attributes {dimension_semantics = [#tpu.dimension_semantics<parallel>, #tpu.dimension_semantics<arbitrary>], iteration_bounds = array<i64: 2, 1>, scalar_prefetch = 0 : i64, scratch_operands = 0 : i64, tpu.core_type = #tpu.core_type<tc>, window_params = [{transform_indices = @transform_0, window_bounds = array<i64: 8, 16>}, {transform_indices = @transform_1, window_bounds = array<i64: 8, 16>}, {transform_indices = @transform_2, window_bounds = array<i64: 8, 1>}, {pipeline_mode = #tpu.pipeline_mode<synchronous>, transform_indices = @transform_3, window_bounds = array<i64: 2, 5>}, {pipeline_mode = #tpu.pipeline_mode<synchronous>, transform_indices = @transform_4, window_bounds = array<i64: 2, 1>}, {pipeline_mode = #tpu.pipeline_mode<synchronous>, transform_indices = @transform_5, window_bounds = array<i64: 16, 18>}, {transform_indices = @transform_6, window_bounds = array<i64: 1, 8, 128>}]} {
    %c0_i32 = arith.constant 0 : i32
    %0 = arith.cmpi eq, %arg1, %c0_i32 : i32
    %1 = arith.extui %0 : i1 to i32
    %c0_i32_0 = arith.constant 0 : i32
    %2 = arith.cmpi ne, %1, %c0_i32_0 : i32
    scf.if %2 {
      %cst_41 = arith.constant 0.000000e+00 : f32
      %144 = vector.broadcast %cst_41 : f32 to vector<1x8x128xf32>
      %c0_42 = arith.constant 0 : index
      %c0_43 = arith.constant 0 : index
      %c0_44 = arith.constant 0 : index
      %145 = vector.load %arg8[%c0_42, %c0_43, %c0_44] : memref<1x8x128xf32, #tpu.memory_space<vmem>>, vector<1x8x128xf32>
      tpu.vector_store %arg8[%c0_42, %c0_43, %c0_44], %144 {strides = array<i32>} : memref<1x8x128xf32, #tpu.memory_space<vmem>>, vector<1x8x128xf32>,
    } else {
    }
    %c0 = arith.constant 0 : index
    %c0_1 = arith.constant 0 : index
    %3 = vector.load %arg2[%c0, %c0_1] : memref<8x16xf32, #tpu.memory_space<vmem>>, vector<8x16xf32>
    %c0_2 = arith.constant 0 : index
    %c0_3 = arith.constant 0 : index
    %4 = vector.load %arg3[%c0_2, %c0_3] : memref<8x16xf32, #tpu.memory_space<vmem>>, vector<8x16xf32>
    %c0_4 = arith.constant 0 : index
    %c0_5 = arith.constant 0 : index
    %5 = vector.load %arg4[%c0_4, %c0_5] : memref<8x1xf32, #tpu.memory_space<vmem>>, vector<8x1xf32>
    %6 = arith.mulf %5, %5 : vector<8x1xf32>
    %7 = arith.subf %3, %4 : vector<8x16xf32>
    %8 = arith.mulf %7, %7 : vector<8x16xf32>
    %9 = math.absf %7 : vector<8x16xf32>
    %cst = arith.constant 1.000000e+00 : f32
    %10 = vector.broadcast %cst : f32 to vector<8x16xf32>
    %11 = arith.cmpf olt, %9, %10 : vector<8x16xf32>
    %cst_6 = arith.constant 5.000000e-01 : f32
    %12 = vector.broadcast %cst_6 : f32 to vector<8x16xf32>
    %13 = arith.mulf %12, %8 : vector<8x16xf32>
    %cst_7 = arith.constant 5.000000e-01 : f32
    %14 = vector.broadcast %cst_7 : f32 to vector<8x16xf32>
    %15 = arith.subf %9, %14 : vector<8x16xf32>
    %16 = arith.select %11, %13, %15 : vector<8x16xi1>, vector<8x16xf32>
    %cst_8 = arith.constant dense<0.000000e+00> : vector<8xf32>
    %17 = vector.multi_reduction <add>, %8, %cst_8 [1] : vector<8x16xf32> to vector<8xf32>
    %18 = vector.shape_cast %17 : vector<8xf32> to vector<8x1xf32>
    %19 = arith.mulf %18, %5 : vector<8x1xf32>
    %20 = vector.shape_cast %19 : vector<8x1xf32> to vector<1x8x1xf32>
    %cst_9 = arith.constant dense<0.000000e+00> : vector<1xf32>
    %21 = vector.multi_reduction <add>, %20, %cst_9 [1, 2] : vector<1x8x1xf32> to vector<1xf32>
    %22 = vector.shape_cast %21 : vector<1xf32> to vector<1x1x1xf32>
    %23 = vector.extract %22[0, 0, 0] : f32 from vector<1x1x1xf32>
    %cst_10 = arith.constant dense<0.000000e+00> : vector<8xf32>
    %24 = vector.multi_reduction <add>, %9, %cst_10 [1] : vector<8x16xf32> to vector<8xf32>
    %25 = vector.shape_cast %24 : vector<8xf32> to vector<8x1xf32>
    %26 = arith.mulf %25, %5 : vector<8x1xf32>
    %27 = vector.shape_cast %26 : vector<8x1xf32> to vector<1x8x1xf32>
    %cst_11 = arith.constant dense<0.000000e+00> : vector<1xf32>
    %28 = vector.multi_reduction <add>, %27, %cst_11 [1, 2] : vector<1x8x1xf32> to vector<1xf32>
    %29 = vector.shape_cast %28 : vector<1xf32> to vector<1x1x1xf32>
    %30 = vector.extract %29[0, 0, 0] : f32 from vector<1x1x1xf32>
    %cst_12 = arith.constant dense<0.000000e+00> : vector<8xf32>
    %31 = vector.multi_reduction <add>, %16, %cst_12 [1] : vector<8x16xf32> to vector<8xf32>
    %32 = vector.shape_cast %31 : vector<8xf32> to vector<8x1xf32>
    %33 = arith.mulf %32, %5 : vector<8x1xf32>
    %34 = vector.shape_cast %33 : vector<8x1xf32> to vector<1x8x1xf32>
    %cst_13 = arith.constant dense<0.000000e+00> : vector<1xf32>
    %35 = vector.multi_reduction <add>, %34, %cst_13 [1, 2] : vector<1x8x1xf32> to vector<1xf32>
    %36 = vector.shape_cast %35 : vector<1xf32> to vector<1x1x1xf32>
    %37 = vector.extract %36[0, 0, 0] : f32 from vector<1x1x1xf32>
    %38 = vector.shape_cast %5 : vector<8x1xf32> to vector<1x8x1xf32>
    %cst_14 = arith.constant dense<0.000000e+00> : vector<1xf32>
    %39 = vector.multi_reduction <add>, %38, %cst_14 [1, 2] : vector<1x8x1xf32> to vector<1xf32>
    %40 = vector.shape_cast %39 : vector<1xf32> to vector<1x1x1xf32>
    %41 = vector.extract %40[0, 0, 0] : f32 from vector<1x1x1xf32>
    %42 = vector.extract_strided_slice %7 {offsets = [0, 1], sizes = [8, 15], strides = [1, 1]} : vector<8x16xf32> to vector<8x15xf32>
    %43 = vector.extract_strided_slice %7 {offsets = [0, 0], sizes = [8, 15], strides = [1, 1]} : vector<8x16xf32> to vector<8x15xf32>
    %44 = arith.subf %42, %43 : vector<8x15xf32>
    %45 = arith.mulf %44, %44 : vector<8x15xf32>
    %cst_15 = arith.constant dense<0.000000e+00> : vector<8xf32>
    %46 = vector.multi_reduction <add>, %45, %cst_15 [1] : vector<8x15xf32> to vector<8xf32>
    %47 = vector.shape_cast %46 : vector<8xf32> to vector<8x1xf32>
    %48 = arith.mulf %47, %6 : vector<8x1xf32>
    %49 = vector.shape_cast %48 : vector<8x1xf32> to vector<1x8x1xf32>
    %cst_16 = arith.constant dense<0.000000e+00> : vector<1xf32>
    %50 = vector.multi_reduction <add>, %49, %cst_16 [1, 2] : vector<1x8x1xf32> to vector<1xf32>
    %51 = vector.shape_cast %50 : vector<1xf32> to vector<1x1x1xf32>
    %52 = vector.extract %51[0, 0, 0] : f32 from vector<1x1x1xf32>
    %53 = vector.extract_strided_slice %3 {offsets = [0, 2], sizes = [8, 14], strides = [1, 1]} : vector<8x16xf32> to vector<8x14xf32>
    %54 = vector.extract_strided_slice %3 {offsets = [0, 1], sizes = [8, 14], strides = [1, 1]} : vector<8x16xf32> to vector<8x14xf32>
    %cst_17 = arith.constant 2.000000e+00 : f32
    %55 = vector.broadcast %cst_17 : f32 to vector<8x14xf32>
    %56 = arith.mulf %55, %54 : vector<8x14xf32>
    %57 = arith.subf %53, %56 : vector<8x14xf32>
    %58 = vector.extract_strided_slice %3 {offsets = [0, 0], sizes = [8, 14], strides = [1, 1]} : vector<8x16xf32> to vector<8x14xf32>
    %59 = arith.addf %57, %58 : vector<8x14xf32>
    %60 = arith.mulf %59, %59 : vector<8x14xf32>
    %cst_18 = arith.constant dense<0.000000e+00> : vector<8xf32>
    %61 = vector.multi_reduction <add>, %60, %cst_18 [1] : vector<8x14xf32> to vector<8xf32>
    %62 = vector.shape_cast %61 : vector<8xf32> to vector<8x1xf32>
    %63 = arith.mulf %62, %5 : vector<8x1xf32>
    %64 = vector.shape_cast %63 : vector<8x1xf32> to vector<1x8x1xf32>
    %cst_19 = arith.constant dense<0.000000e+00> : vector<1xf32>
    %65 = vector.multi_reduction <add>, %64, %cst_19 [1, 2] : vector<1x8x1xf32> to vector<1xf32>
    %66 = vector.shape_cast %65 : vector<1xf32> to vector<1x1x1xf32>
    %67 = vector.extract %66[0, 0, 0] : f32 from vector<1x1x1xf32>
    %c0_20 = arith.constant 0 : index
    %c0_21 = arith.constant 0 : index
    %68 = vector.load %arg7[%c0_20, %c0_21] : memref<16x18xf32, #tpu.memory_space<vmem>>, vector<16x18xf32>
    %cst_22 = arith.constant dense<0.000000e+00> : vector<8x18xf32>
    %69 = tpu.matmul %3, %68, %cst_22 {dimension_numbers = #tpu.dot_dimension_numbers<[1], [0], [0], [1], [0, 0, 1, 1], [], []>} : vector<8x16xf32>, vector<16x18xf32>, vector<8x18xf32> -> vector<8x18xf32>
    %cst_23 = arith.constant dense<0.000000e+00> : vector<8x18xf32>
    %70 = tpu.matmul %4, %68, %cst_23 {dimension_numbers = #tpu.dot_dimension_numbers<[1], [0], [0], [1], [0, 0, 1, 1], [], []>} : vector<8x16xf32>, vector<16x18xf32>, vector<8x18xf32> -> vector<8x18xf32>
    %71 = vector.extract_strided_slice %69 {offsets = [0, 0], sizes = [8, 9], strides = [1, 1]} : vector<8x18xf32> to vector<8x9xf32>
    %72 = vector.extract_strided_slice %69 {offsets = [0, 0], sizes = [8, 9], strides = [1, 1]} : vector<8x18xf32> to vector<8x9xf32>
    %73 = arith.mulf %71, %72 : vector<8x9xf32>
    %74 = vector.extract_strided_slice %69 {offsets = [0, 9], sizes = [8, 9], strides = [1, 1]} : vector<8x18xf32> to vector<8x9xf32>
    %75 = vector.extract_strided_slice %69 {offsets = [0, 9], sizes = [8, 9], strides = [1, 1]} : vector<8x18xf32> to vector<8x9xf32>
    %76 = arith.mulf %74, %75 : vector<8x9xf32>
    %77 = arith.addf %73, %76 : vector<8x9xf32>
    %78 = vector.extract_strided_slice %70 {offsets = [0, 0], sizes = [8, 9], strides = [1, 1]} : vector<8x18xf32> to vector<8x9xf32>
    %79 = vector.extract_strided_slice %70 {offsets = [0, 0], sizes = [8, 9], strides = [1, 1]} : vector<8x18xf32> to vector<8x9xf32>
    %80 = arith.mulf %78, %79 : vector<8x9xf32>
    %81 = vector.extract_strided_slice %70 {offsets = [0, 9], sizes = [8, 9], strides = [1, 1]} : vector<8x18xf32> to vector<8x9xf32>
    %82 = vector.extract_strided_slice %70 {offsets = [0, 9], sizes = [8, 9], strides = [1, 1]} : vector<8x18xf32> to vector<8x9xf32>
    %83 = arith.mulf %81, %82 : vector<8x9xf32>
    %84 = arith.addf %80, %83 : vector<8x9xf32>
    %85 = arith.subf %77, %84 : vector<8x9xf32>
    %86 = tpu.iota {dimensions = array<i32: 1>} : vector<1x9xi32>
    %c0_i32_24 = arith.constant 0 : i32
    %87 = vector.broadcast %c0_i32_24 : i32 to vector<1x9xi32>
    %88 = arith.cmpi eq, %86, %87 : vector<1x9xi32>
    %cst_25 = arith.constant 1.000000e+00 : f32
    %cst_26 = arith.constant 2.000000e+00 : f32
    %89 = vector.broadcast %cst_25 : f32 to vector<1x9xf32>
    %90 = vector.broadcast %cst_26 : f32 to vector<1x9xf32>
    %91 = arith.select %88, %89, %90 : vector<1x9xi1>, vector<1x9xf32>
    %c8_i32 = arith.constant 8 : i32
    %92 = vector.broadcast %c8_i32 : i32 to vector<1x9xi32>
    %93 = arith.cmpi eq, %86, %92 : vector<1x9xi32>
    %cst_27 = arith.constant 1.000000e+00 : f32
    %94 = vector.broadcast %cst_27 : f32 to vector<1x9xf32>
    %95 = arith.select %93, %94, %91 : vector<1x9xi1>, vector<1x9xf32>
    %96 = vector.broadcast %95 : vector<1x9xf32> to vector<8x9xf32>
    %97 = arith.mulf %96, %85 : vector<8x9xf32>
    %98 = arith.mulf %97, %85 : vector<8x9xf32>
    %cst_28 = arith.constant dense<0.000000e+00> : vector<8xf32>
    %99 = vector.multi_reduction <add>, %98, %cst_28 [1] : vector<8x9xf32> to vector<8xf32>
    %100 = vector.shape_cast %99 : vector<8xf32> to vector<8x1xf32>
    %101 = arith.mulf %100, %6 : vector<8x1xf32>
    %102 = vector.shape_cast %101 : vector<8x1xf32> to vector<1x8x1xf32>
    %cst_29 = arith.constant dense<0.000000e+00> : vector<1xf32>
    %103 = vector.multi_reduction <add>, %102, %cst_29 [1, 2] : vector<1x8x1xf32> to vector<1xf32>
    %104 = vector.shape_cast %103 : vector<1xf32> to vector<1x1x1xf32>
    %105 = vector.extract %104[0, 0, 0] : f32 from vector<1x1x1xf32>
    %106 = tpu.iota {dimensions = array<i32: 1>} : vector<1x8x128xi32>
    %cst_30 = arith.constant 0.000000e+00 : f32
    %107 = vector.broadcast %cst_30 : f32 to vector<1x8x128xf32>
    %c0_i32_31 = arith.constant 0 : i32
    %108 = vector.broadcast %c0_i32_31 : i32 to vector<1x8x128xi32>
    %109 = arith.cmpi eq, %106, %108 : vector<1x8x128xi32>
    %110 = vector.broadcast %23 : f32 to vector<1x8x128xf32>
    %111 = arith.select %109, %110, %107 : vector<1x8x128xi1>, vector<1x8x128xf32>
    %c1_i32 = arith.constant 1 : i32
    %112 = vector.broadcast %c1_i32 : i32 to vector<1x8x128xi32>
    %113 = arith.cmpi eq, %106, %112 : vector<1x8x128xi32>
    %114 = vector.broadcast %30 : f32 to vector<1x8x128xf32>
    %115 = arith.select %113, %114, %111 : vector<1x8x128xi1>, vector<1x8x128xf32>
    %c2_i32 = arith.constant 2 : i32
    %116 = vector.broadcast %c2_i32 : i32 to vector<1x8x128xi32>
    %117 = arith.cmpi eq, %106, %116 : vector<1x8x128xi32>
    %118 = vector.broadcast %37 : f32 to vector<1x8x128xf32>
    %119 = arith.select %117, %118, %115 : vector<1x8x128xi1>, vector<1x8x128xf32>
    %c3_i32 = arith.constant 3 : i32
    %120 = vector.broadcast %c3_i32 : i32 to vector<1x8x128xi32>
    %121 = arith.cmpi eq, %106, %120 : vector<1x8x128xi32>
    %122 = vector.broadcast %52 : f32 to vector<1x8x128xf32>
    %123 = arith.select %121, %122, %119 : vector<1x8x128xi1>, vector<1x8x128xf32>
    %c4_i32 = arith.constant 4 : i32
    %124 = vector.broadcast %c4_i32 : i32 to vector<1x8x128xi32>
    %125 = arith.cmpi eq, %106, %124 : vector<1x8x128xi32>
    %126 = vector.broadcast %67 : f32 to vector<1x8x128xf32>
    %127 = arith.select %125, %126, %123 : vector<1x8x128xi1>, vector<1x8x128xf32>
    %c5_i32 = arith.constant 5 : i32
    %128 = vector.broadcast %c5_i32 : i32 to vector<1x8x128xi32>
    %129 = arith.cmpi eq, %106, %128 : vector<1x8x128xi32>
    %130 = vector.broadcast %105 : f32 to vector<1x8x128xf32>
    %131 = arith.select %129, %130, %127 : vector<1x8x128xi1>, vector<1x8x128xf32>
    %c6_i32 = arith.constant 6 : i32
    %132 = vector.broadcast %c6_i32 : i32 to vector<1x8x128xi32>
    %133 = arith.cmpi eq, %106, %132 : vector<1x8x128xi32>
    %134 = vector.broadcast %41 : f32 to vector<1x8x128xf32>
    %135 = arith.select %133, %134, %131 : vector<1x8x128xi1>, vector<1x8x128xf32>
    %c0_32 = arith.constant 0 : index
    %c0_33 = arith.constant 0 : index
    %c0_34 = arith.constant 0 : index
    %136 = vector.load %arg8[%c0_32, %c0_33, %c0_34] : memref<1x8x128xf32, #tpu.memory_space<vmem>>, vector<1x8x128xf32>
    %137 = arith.addf %136, %135 : vector<1x8x128xf32>
    %c0_35 = arith.constant 0 : index
    %c0_36 = arith.constant 0 : index
    %c0_37 = arith.constant 0 : index
    %138 = vector.load %arg8[%c0_35, %c0_36, %c0_37] : memref<1x8x128xf32, #tpu.memory_space<vmem>>, vector<1x8x128xf32>
    tpu.vector_store %arg8[%c0_35, %c0_36, %c0_37], %137 {strides = array<i32>} : memref<1x8x128xf32, #tpu.memory_space<vmem>>, vector<1x8x128xf32>,
    %c0_i32_38 = arith.constant 0 : i32
    %139 = arith.cmpi eq, %arg0, %c0_i32_38 : i32
    %c0_i32_39 = arith.constant 0 : i32
    %140 = arith.cmpi eq, %arg1, %c0_i32_39 : i32
    %141 = arith.andi %139, %140 : i1
    %142 = arith.extui %141 : i1 to i32
    %c0_i32_40 = arith.constant 0 : i32
    %143 = arith.cmpi ne, %142, %c0_i32_40 : i32
    scf.if %143 {
      %c0_41 = arith.constant 0 : index
      %c0_42 = arith.constant 0 : index
      %144 = vector.load %arg5[%c0_41, %c0_42] : memref<2x5xf32, #tpu.memory_space<vmem>>, vector<2x5xf32>
      %c0_43 = arith.constant 0 : index
      %c0_44 = arith.constant 0 : index
      %145 = vector.load %arg6[%c0_43, %c0_44] : memref<2x1xi32, #tpu.memory_space<vmem>>, vector<2x1xi32>
      %cst_45 = arith.constant dense<0xFF800000> : vector<2xf32>
      %146 = vector.multi_reduction <maximumf>, %144, %cst_45 [1] : vector<2x5xf32> to vector<2xf32>
      %147 = vector.shape_cast %146 : vector<2xf32> to vector<2x1xf32>
      %148 = vector.broadcast %147 : vector<2x1xf32> to vector<2x5xf32>
      %149 = arith.subf %144, %148 : vector<2x5xf32>
      %150 = math.exp %149 : vector<2x5xf32>
      %cst_46 = arith.constant dense<0.000000e+00> : vector<2xf32>
      %151 = vector.multi_reduction <add>, %150, %cst_46 [1] : vector<2x5xf32> to vector<2xf32>
      %152 = vector.shape_cast %151 : vector<2xf32> to vector<2x1xf32>
      %153 = math.log %152 : vector<2x1xf32>
      %154 = arith.addf %147, %153 : vector<2x1xf32>
      %155 = tpu.iota {dimensions = array<i32: 1>} : vector<2x5xi32>
      %156 = vector.broadcast %145 : vector<2x1xi32> to vector<2x5xi32>
      %157 = arith.cmpi eq, %155, %156 : vector<2x5xi32>
      %cst_47 = arith.constant 0.000000e+00 : f32
      %158 = vector.broadcast %cst_47 : f32 to vector<2x5xf32>
      %159 = arith.select %157, %144, %158 : vector<2x5xi1>, vector<2x5xf32>
      %cst_48 = arith.constant dense<0.000000e+00> : vector<2xf32>
      %160 = vector.multi_reduction <add>, %159, %cst_48 [1] : vector<2x5xf32> to vector<2xf32>
      %161 = vector.shape_cast %160 : vector<2xf32> to vector<2x1xf32>
      %162 = arith.subf %154, %161 : vector<2x1xf32>
      %163 = vector.shape_cast %162 : vector<2x1xf32> to vector<1x2x1xf32>
      %cst_49 = arith.constant dense<0.000000e+00> : vector<1xf32>
      %164 = vector.multi_reduction <add>, %163, %cst_49 [1, 2] : vector<1x2x1xf32> to vector<1xf32>
      %165 = vector.shape_cast %164 : vector<1xf32> to vector<1x1x1xf32>
      %166 = vector.extract %165[0, 0, 0] : f32 from vector<1x1x1xf32>
      %c0_50 = arith.constant 0 : index
      %c0_51 = arith.constant 0 : index
      %c0_52 = arith.constant 0 : index
      %167 = vector.load %arg8[%c0_50, %c0_51, %c0_52] : memref<1x8x128xf32, #tpu.memory_space<vmem>>, vector<1x8x128xf32>
      %c7_i32 = arith.constant 7 : i32
      %168 = vector.broadcast %c7_i32 : i32 to vector<1x8x128xi32>
      %169 = arith.cmpi eq, %106, %168 : vector<1x8x128xi32>
      %cst_53 = arith.constant 0.000000e+00 : f32
      %170 = vector.broadcast %166 : f32 to vector<1x8x128xf32>
      %171 = vector.broadcast %cst_53 : f32 to vector<1x8x128xf32>
      %172 = arith.select %169, %170, %171 : vector<1x8x128xi1>, vector<1x8x128xf32>
      %173 = arith.addf %167, %172 : vector<1x8x128xf32>
      %c0_54 = arith.constant 0 : index
      %c0_55 = arith.constant 0 : index
      %c0_56 = arith.constant 0 : index
      %174 = vector.load %arg8[%c0_54, %c0_55, %c0_56] : memref<1x8x128xf32, #tpu.memory_space<vmem>>, vector<1x8x128xf32>
      tpu.vector_store %arg8[%c0_54, %c0_55, %c0_56], %173 {strides = array<i32>} : memref<1x8x128xf32, #tpu.memory_space<vmem>>, vector<1x8x128xf32>,
    } else {
    }
    return
  }
  func.func @transform_0(%arg0: i32, %arg1: i32) -> (i32, i32) {
    %c1_i32 = arith.constant 1 : i32
    %0 = arith.muli %arg0, %c1_i32 : i32
    %1 = arith.addi %0, %arg1 : i32
    %c0_i32 = arith.constant 0 : i32
    %c0_i32_0 = arith.constant 0 : i32
    return %1, %c0_i32 : i32, i32
  }
  func.func @transform_1(%arg0: i32, %arg1: i32) -> (i32, i32) {
    %c1_i32 = arith.constant 1 : i32
    %0 = arith.muli %arg0, %c1_i32 : i32
    %1 = arith.addi %0, %arg1 : i32
    %c0_i32 = arith.constant 0 : i32
    %c0_i32_0 = arith.constant 0 : i32
    return %1, %c0_i32 : i32, i32
  }
  func.func @transform_2(%arg0: i32, %arg1: i32) -> (i32, i32) {
    %c1_i32 = arith.constant 1 : i32
    %0 = arith.muli %arg0, %c1_i32 : i32
    %1 = arith.addi %0, %arg1 : i32
    %c0_i32 = arith.constant 0 : i32
    %c0_i32_0 = arith.constant 0 : i32
    return %1, %c0_i32 : i32, i32
  }
  func.func @transform_3(%arg0: i32, %arg1: i32) -> (i32, i32) {
    %c0_i32 = arith.constant 0 : i32
    %c0_i32_0 = arith.constant 0 : i32
    %c0_i32_1 = arith.constant 0 : i32
    return %c0_i32, %c0_i32_0 : i32, i32
  }
  func.func @transform_4(%arg0: i32, %arg1: i32) -> (i32, i32) {
    %c0_i32 = arith.constant 0 : i32
    %c0_i32_0 = arith.constant 0 : i32
    %c0_i32_1 = arith.constant 0 : i32
    return %c0_i32, %c0_i32_0 : i32, i32
  }
  func.func @transform_5(%arg0: i32, %arg1: i32) -> (i32, i32) {
    %c0_i32 = arith.constant 0 : i32
    %c0_i32_0 = arith.constant 0 : i32
    %c0_i32_1 = arith.constant 0 : i32
    return %c0_i32, %c0_i32_0 : i32, i32
  }
  func.func @transform_6(%arg0: i32, %arg1: i32) -> (i32, i32, i32) {
    %c0_i32 = arith.constant 0 : i32
    %c0_i32_0 = arith.constant 0 : i32
    %c0_i32_1 = arith.constant 0 : i32
    return %arg0, %c0_i32, %c0_i32_0 : i32, i32, i32
  }
}

</mosaic_0001>

<llo_original>
// kernel: multitask_loss.1
$region0: #{multitask_loss.1}
  #allocation0 [shape = 'u32[]', space=smem, size = 0x4, offset = 0x4, fixed_abs, tag = 'smem constant byte address 0x4 - core index']
  #allocation1 [shape = 'u32[72,128]{1,0:T(1,128)}', space=vmem, size = 0x9000, scoped, tag = 'internal scratch']
  %s0 = inlined_call_operand.vmem [shape: f32[16,16], index: 0, kind: input, shape index: {}]
  %s1 = inlined_call_operand.vmem [shape: f32[16,16], index: 1, kind: input, shape index: {}]
  %s2 = inlined_call_operand.vmem [shape: f32[16,1], index: 2, kind: input, shape index: {}]
  %s3 = inlined_call_operand.vmem [shape: f32[2,5], index: 3, kind: input, shape index: {}]
  %s4 = inlined_call_operand.vmem [shape: s32[2,1], index: 4, kind: input, shape index: {}]
  %s5 = inlined_call_operand.vmem [shape: f32[16,18], index: 5, kind: input, shape index: {}]
  %s6 = inlined_call_operand.vmem [shape: f32[2,8,128], index: 6, kind: output, shape index: {}]
  %s7 = sld [smem:[#allocation0]]
  $region65: #{multitask_loss.1} parent=0
    _
  %s9 = ssub.s32 1, %s7
  %s10 = scalar_select 0, %s9, %s7
  loop: start=0, step=1, limit=4
  $region2: #{multitask_loss.1} parent=0 // loop_pre_header
    _
  $region3: #{multitask_loss.1} parent=0 // loop_header
    %s12 = sphi 0, %s16
    %p13 = scmp.ge.s32.totalorder %s12, 4
    %s19 = sphi 0, %s31
    %s20 = sphi 0, %s27
    %s21 = sphi 0, %s19
    %s22 = sphi 0, %s20
    %s23 = sphi 0, %s21
    %s24 = sphi 0, %s22
    %s36 = sphi 0, %s38
    %s39 = sphi 0, %s36
    %s40 = sphi 0, %s39
    %s56 = sphi 0, %s40
    %s64 = sphi 0, %s66
    %s67 = sphi 0, %s64
    %s68 = sphi 0, %s67
    %s84 = sphi 0, %s68
    %s92 = sphi 0, %s94
    %s95 = sphi 0, %s92
    %s96 = sphi 0, %s95
    %s112 = sphi 0, %s96
    %s116 = sphi 0, %s116
    %s118 = sphi 0, %s116
    %s119 = sphi 0, %s118
    %s133 = sphi 0, %s119
    %s137 = sphi 0, %s137
    %s139 = sphi 0, %s137
    %s140 = sphi 0, %s139
    %s154 = sphi 0, %s140
    %s158 = sphi 0, %s158
    %s160 = sphi 0, %s158
    %s161 = sphi 0, %s160
    %s175 = sphi 0, %s161
    %s181 = sphi 0, %s183
    %s184 = sphi 0, %s181
    %s185 = sphi 0, %s184
    %s201 = sphi 0, %s185
  $region4: #{multitask_loss.1} parent=0 // loop_header_branch
    %15 = sbr.rel (%p13) target = $region8
  $region5: #{multitask_loss.1} parent=0 // loop_body
    %s17 = ssub.s32 %s12, 1
    %s18 = ssub.s32 %s12, 2
    %s25 = sadd.s32 1, %s20
    %p26 = scmp.ge.s32.totalorder %s25, 1
    %s27 = scalar_select %p26, 0, %s25
    %s28 = sadd.s32 1, %s19
    %s29 = scalar_select %p26, %s28, %s19
    %p30 = scmp.ge.s32.totalorder %s29, 2
    %s31 = scalar_select %p30, 0, %s29
    %s32 = sadd.s32 %s19, %s20
    %s33 = sadd.s32 %s31, %s27
    %s34 = ssub.s32 %s32, %s33
    %p35 = scmp.eq.s32.totalorder %s34, 0
    %s37 = sadd.s32 %s36, 1
    %s38 = scalar_select %p35, %s36, %s37
    %p41 = pneg %p35
    %p42 = scmp.eq.s32.totalorder %s12, 1
    %p43 = por %p41, %p42
    %p44 = scmp.ne.s32.totalorder %s36, %s39
    %p45 = scmp.eq.s32.totalorder %s12, 0
    %p46 = por %p44, %p45
    %p47 = scmp.ne.s32.totalorder %s36, %s39
    %p48 = scmp.eq.s32.totalorder %s17, 1
    %p49 = por %p47, %p48
    %p50 = scmp.ne.s32.totalorder %s39, %s40
    %p51 = scmp.eq.s32.totalorder %s17, 0
    %p52 = por %p50, %p51
    %p53 = scmp.ne.s32.totalorder %s39, %s40
    %p54 = scmp.eq.s32.totalorder %s18, 1
    %p55 = por %p53, %p54
    %p57 = scmp.ne.s32.totalorder %s40, %s56
    %p58 = scmp.eq.s32.totalorder %s18, 0
    %p59 = por %p57, %p58
    %s60 = sadd.s32 %s19, %s20
    %s61 = sadd.s32 %s31, %s27
    %s62 = ssub.s32 %s60, %s61
    %p63 = scmp.eq.s32.totalorder %s62, 0
    %s65 = sadd.s32 %s64, 1
    %s66 = scalar_select %p63, %s64, %s65
    %p69 = pneg %p63
    %p70 = scmp.eq.s32.totalorder %s12, 1
    %p71 = por %p69, %p70
    %p72 = scmp.ne.s32.totalorder %s64, %s67
    %p73 = scmp.eq.s32.totalorder %s12, 0
    %p74 = por %p72, %p73
    %p75 = scmp.ne.s32.totalorder %s64, %s67
    %p76 = scmp.eq.s32.totalorder %s17, 1
    %p77 = por %p75, %p76
    %p78 = scmp.ne.s32.totalorder %s67, %s68
    %p79 = scmp.eq.s32.totalorder %s17, 0
    %p80 = por %p78, %p79
    %p81 = scmp.ne.s32.totalorder %s67, %s68
    %p82 = scmp.eq.s32.totalorder %s18, 1
    %p83 = por %p81, %p82
    %p85 = scmp.ne.s32.totalorder %s68, %s84
    %p86 = scmp.eq.s32.totalorder %s18, 0
    %p87 = por %p85, %p86
    %s88 = sadd.s32 %s19, %s20
    %s89 = sadd.s32 %s31, %s27
    %s90 = ssub.s32 %s88, %s89
    %p91 = scmp.eq.s32.totalorder %s90, 0
    %s93 = sadd.s32 %s92, 1
    %s94 = scalar_select %p91, %s92, %s93
    %p97 = pneg %p91
    %p98 = scmp.eq.s32.totalorder %s12, 1
    %p99 = por %p97, %p98
    %p100 = scmp.ne.s32.totalorder %s92, %s95
    %p101 = scmp.eq.s32.totalorder %s12, 0
    %p102 = por %p100, %p101
    %p103 = scmp.ne.s32.totalorder %s92, %s95
    %p104 = scmp.eq.s32.totalorder %s17, 1
    %p105 = por %p103, %p104
    %p106 = scmp.ne.s32.totalorder %s95, %s96
    %p107 = scmp.eq.s32.totalorder %s17, 0
    %p108 = por %p106, %p107
    %p109 = scmp.ne.s32.totalorder %s95, %s96
    %p110 = scmp.eq.s32.totalorder %s18, 1
    %p111 = por %p109, %p110
    %p113 = scmp.ne.s32.totalorder %s96, %s112
    %p114 = scmp.eq.s32.totalorder %s18, 0
    %p115 = por %p113, %p114
    %s117 = sadd.s32 %s116, 1
    %p120 = scmp.eq.s32.totalorder %s12, 1
    %p121 = scmp.ne.s32.totalorder %s116, %s118
    %p122 = scmp.eq.s32.totalorder %s12, 0
    %p123 = por %p121, %p122
    %p124 = scmp.ne.s32.totalorder %s116, %s118
    %p125 = scmp.eq.s32.totalorder %s17, 1
    %p126 = por %p124, %p125
    %p127 = scmp.ne.s32.totalorder %s118, %s119
    %p128 = scmp.eq.s32.totalorder %s17, 0
    %p129 = por %p127, %p128
    %p130 = scmp.ne.s32.totalorder %s118, %s119
    %p131 = scmp.eq.s32.totalorder %s18, 1
    %p132 = por %p130, %p131
    %p134 = scmp.ne.s32.totalorder %s119, %s133
    %p135 = scmp.eq.s32.totalorder %s18, 0
    %p136 = por %p134, %p135
    %s138 = sadd.s32 %s137, 1
    %p141 = scmp.eq.s32.totalorder %s12, 1
    %p142 = scmp.ne.s32.totalorder %s137, %s139
    %p143 = scmp.eq.s32.totalorder %s12, 0
    %p144 = por %p142, %p143
    %p145 = scmp.ne.s32.totalorder %s137, %s139
    %p146 = scmp.eq.s32.totalorder %s17, 1
    %p147 = por %p145, %p146
    %p148 = scmp.ne.s32.totalorder %s139, %s140
    %p149 = scmp.eq.s32.totalorder %s17, 0
    %p150 = por %p148, %p149
    %p151 = scmp.ne.s32.totalorder %s139, %s140
    %p152 = scmp.eq.s32.totalorder %s18, 1
    %p153 = por %p151, %p152
    %p155 = scmp.ne.s32.totalorder %s140, %s154
    %p156 = scmp.eq.s32.totalorder %s18, 0
    %p157 = por %p155, %p156
    %s159 = sadd.s32 %s158, 1
    %p162 = scmp.eq.s32.totalorder %s12, 1
    %p163 = scmp.ne.s32.totalorder %s158, %s160
    %p164 = scmp.eq.s32.totalorder %s12, 0
    %p165 = por %p163, %p164
    %p166 = scmp.ne.s32.totalorder %s158, %s160
    %p167 = scmp.eq.s32.totalorder %s17, 1
    %p168 = por %p166, %p167
    %p169 = scmp.ne.s32.totalorder %s160, %s161
    %p170 = scmp.eq.s32.totalorder %s17, 0
    %p171 = por %p169, %p170
    %p172 = scmp.ne.s32.totalorder %s160, %s161
    %p173 = scmp.eq.s32.totalorder %s18, 1
    %p174 = por %p172, %p173
    %p176 = scmp.ne.s32.totalorder %s161, %s175
    %p177 = scmp.eq.s32.totalorder %s18, 0
    %p178 = por %p176, %p177
    %s179 = ssub.s32 %s19, %s31
    %p180 = scmp.eq.s32.totalorder %s179, 0
    %s182 = sadd.s32 %s181, 1
    %s183 = scalar_select %p180, %s181, %s182
    %p186 = pneg %p180
    %p187 = scmp.eq.s32.totalorder %s12, 1
    %p188 = por %p186, %p187
    %p189 = scmp.ne.s32.totalorder %s181, %s184
    %p190 = scmp.eq.s32.totalorder %s12, 0
    %p191 = por %p189, %p190
    %p192 = scmp.ne.s32.totalorder %s181, %s184
    %p193 = scmp.eq.s32.totalorder %s17, 1
    %p194 = por %p192, %p193
    %p195 = scmp.ne.s32.totalorder %s184, %s185
    %p196 = scmp.eq.s32.totalorder %s17, 0
    %p197 = por %p195, %p196
    %p198 = scmp.ne.s32.totalorder %s184, %s185
    %p199 = scmp.eq.s32.totalorder %s18, 1
    %p200 = por %p198, %p199
    %p202 = scmp.ne.s32.totalorder %s185, %s201
    %p203 = scmp.eq.s32.totalorder %s18, 0
    %p204 = por %p202, %p203
    %p205 = scmp.le.s32.totalorder 1, %s12
    %p206 = scmp.lt.s32.totalorder %s12, 3
    %p207 = pnand %p205, %p206
    %p208 = pneg %p207
    // Predicated region
    $region9: #{multitask_loss.1} parent=5 // pred_check
      _
    $region10: #{multitask_loss.1} parent=5 // pred_check_branch
      %210 = sbr.rel (%p207) target = $region12
    $region11: #{multitask_loss.1} parent=5 // pred_region
      %s211 = ssub.s32 %s12, 1
      // Predicated region
      $region13: #{multitask_loss.1} parent=11 // pred_check
        %p212 = pneg %p129
      $region14: #{multitask_loss.1} parent=11 // pred_check_branch
        %214 = sbr.rel (%p212) target = $region16
      $region15: #{multitask_loss.1} parent=11 // pred_region
        _
      $region16: #{multitask_loss.1} parent=11 // pred_fallthru
        _
      // Predicated region
      $region17: #{multitask_loss.1} parent=11 // pred_check
        %p215 = pneg %p150
      $region18: #{multitask_loss.1} parent=11 // pred_check_branch
        %217 = sbr.rel (%p215) target = $region20
      $region19: #{multitask_loss.1} parent=11 // pred_region
        _
      $region20: #{multitask_loss.1} parent=11 // pred_fallthru
        _
      // Predicated region
      $region21: #{multitask_loss.1} parent=11 // pred_check
        %p218 = pneg %p171
      $region22: #{multitask_loss.1} parent=11 // pred_check_branch
        %220 = sbr.rel (%p218) target = $region24
      $region23: #{multitask_loss.1} parent=11 // pred_region
        _
      $region24: #{multitask_loss.1} parent=11 // pred_fallthru
        _
    $region12: #{multitask_loss.1} parent=5 // pred_fallthru
      _
    %p221 = scmp.lt.s32.totalorder %s12, 2
    // Predicated region
    $region25: #{multitask_loss.1} parent=5 // pred_check
      %p222 = pneg %p221
    $region26: #{multitask_loss.1} parent=5 // pred_check_branch
      %224 = sbr.rel (%p222) target = $region28
    $region27: #{multitask_loss.1} parent=5 // pred_region
      // Predicated region
      $region29: #{multitask_loss.1} parent=27 // pred_check
        %p225 = pneg %p46
      $region30: #{multitask_loss.1} parent=27 // pred_check_branch
        %227 = sbr.rel (%p225) target = $region32
      $region31: #{multitask_loss.1} parent=27 // pred_region
        %s228 = sadd.s32 %s19, %s20
        %p229 = scmp.lt.s32.totalorder %s228, 1
        %s230 = scalar_select %p229, %s228, 1
        %s231 = smul.addr %s230, 8
        %s232 = scalar_lea.vmem %s0, %s231
        %s233 = sadd.s32 %s19, %s20
      $region32: #{multitask_loss.1} parent=27 // pred_fallthru
        _
      // Predicated region
      $region33: #{multitask_loss.1} parent=27 // pred_check
        %p234 = pneg %p74
      $region34: #{multitask_loss.1} parent=27 // pred_check_branch
        %236 = sbr.rel (%p234) target = $region36
      $region35: #{multitask_loss.1} parent=27 // pred_region
        %s237 = sadd.s32 %s19, %s20
        %p238 = scmp.lt.s32.totalorder %s237, 1
        %s239 = scalar_select %p238, %s237, 1
        %s240 = smul.addr %s239, 8
        %s241 = scalar_lea.vmem %s1, %s240
        %s242 = sadd.s32 %s19, %s20
      $region36: #{multitask_loss.1} parent=27 // pred_fallthru
        _
      // Predicated region
      $region37: #{multitask_loss.1} parent=27 // pred_check
        %p243 = pneg %p102
      $region38: #{multitask_loss.1} parent=27 // pred_check_branch
        %245 = sbr.rel (%p243) target = $region40
      $region39: #{multitask_loss.1} parent=27 // pred_region
        %s246 = sadd.s32 %s19, %s20
        %p247 = scmp.lt.s32.totalorder %s246, 1
        %s248 = scalar_select %p247, %s246, 1
        %s249 = smul.addr %s248, 8
        %s250 = scalar_lea.vmem %s2, %s249
        %s251 = sadd.s32 %s19, %s20
      $region40: #{multitask_loss.1} parent=27 // pred_fallthru
        _
    $region28: #{multitask_loss.1} parent=5 // pred_fallthru
      _
    %p252 = scmp.le.s32.totalorder 1, %s12
    %p253 = scmp.lt.s32.totalorder %s12, 3
    %p254 = pnand %p252, %p253
    %p255 = pneg %p254
    // Predicated region
    $region41: #{multitask_loss.1} parent=5 // pred_check
      _
    $region42: #{multitask_loss.1} parent=5 // pred_check_branch
      %257 = sbr.rel (%p254) target = $region44
    $region43: #{multitask_loss.1} parent=5 // pred_region
      %s258 = ssub.s32 %s12, 1
      %s259 = sadd.s32 %s21, %s22
      %p260 = scmp.lt.s32.totalorder %s259, 1
      %s261 = scalar_select %p260, %s259, 1
      %s262 = smul.addr %s261, 8
      %s263 = scalar_lea.vmem %s0, %s262
      %p264 = pneg %p52
      %p265 = pneg %p49
      %s266 = sadd.s32 %s21, %s22
      %p267 = scmp.lt.s32.totalorder %s266, 1
      %s268 = scalar_select %p267, %s266, 1
      %s269 = smul.addr %s268, 8
      %s270 = scalar_lea.vmem %s1, %s269
      %p271 = pneg %p80
      %p272 = pneg %p77
      %s273 = sadd.s32 %s21, %s22
      %p274 = scmp.lt.s32.totalorder %s273, 1
      %s275 = scalar_select %p274, %s273, 1
      %s276 = smul.addr %s275, 8
      %s277 = scalar_lea.vmem %s2, %s276
      %p278 = pneg %p108
      %p279 = pneg %p105
      %p280 = pneg %p129
      %p281 = pneg %p126
      %p282 = pneg %p150
      %p283 = pneg %p147
      %p284 = pneg %p171
      %p285 = pneg %p168
      %p286 = pneg %p197
      %p287 = pneg %p194
      %p288 = scmp.lt.s32.totalorder %s21, 1
      %s289 = scalar_select %p288, %s21, 1
      %s290 = smul.addr %s289, 8
      %s291 = scalar_lea.vmem %s6, %s290
      %s292 = sadd.s32 %s21, %s22
      %p293 = scmp.lt.s32.totalorder %s292, 1
      %s294 = scalar_select %p293, %s292, 1
      %s295 = smul.addr %s294, 8
      %s296 = scalar_lea.vmem %s0, %s295
      %s297 = sadd.s32 %s21, %s22
      %s298 = sadd.s32 %s21, %s22
      %p299 = scmp.lt.s32.totalorder %s298, 1
      %s300 = scalar_select %p299, %s298, 1
      %s301 = smul.addr %s300, 8
      %s302 = scalar_lea.vmem %s1, %s301
      %s303 = sadd.s32 %s21, %s22
      %s304 = sadd.s32 %s21, %s22
      %p305 = scmp.lt.s32.totalorder %s304, 1
      %s306 = scalar_select %p305, %s304, 1
      %s307 = smul.addr %s306, 8
      %s308 = scalar_lea.vmem %s2, %s307
      %s309 = sadd.s32 %s21, %s22
      %p310 = scmp.lt.s32.totalorder %s21, 1
      %s311 = scalar_select %p310, %s21, 1
      %s312 = smul.addr %s311, 8
      %s313 = scalar_lea.vmem %s6, %s312
      %p314 = scmp.eq.s32.totalorder %s22, 0
      // Predicated region
      $region45: #{multitask_loss.1} parent=43 // pred_check
        %p315 = pneg %p314
      $region46: #{multitask_loss.1} parent=43 // pred_check_branch
        %317 = sbr.rel (%p315) target = $region48
      $region47: #{multitask_loss.1} parent=43 // pred_region
        %318 = vst [vmem:[%s313] sm:$0xff] 0.0
      $region48: #{multitask_loss.1} parent=43 // pred_fallthru
        _
      %v319 = vld [vmem:[%s296] sm:$0xff]
      %v320 = vld [vmem:[%s302] sm:$0xff]
      %v321 = vld [vmem:[%s308] sm:$0xff]
      %v322 = vmul.f32 %v321, %v321
      %v323 = vsub.f32 %v319, %v320
      %v324 = vmul.f32 %v323, %v323
      %v325 = vand.u32 2147483647, %v323
      %vm326 = vcmp.lt.f32.partialorder %v325, 1.0
      %v327 = vmul.f32 %v324, 0.5
      %v328 = vsub.f32 %v325, 0.5
      %v329 = vsel %vm326, %v327, %v328
      %vm330 = vcmask 130048
      %v331 = vsel %vm330, %v324, 0.0
      %332 = vadd.xlane.f32.xlu0 %v331
      %v333 = vpop.xlane.xlu0 %332
      %v334 = vmul.f32 %v333, %v321
      %vm335 = vcmask 7168
      %v336 = vsel %vm335, %v334, 0.0
      %337 = vadd.xlane.f32.xlu0 %v336
      %v338 = vpop.xlane.xlu0 %337
      %v339 = vrot.slane %v338, 4
      %v340 = vadd.f32 %v338, %v339
      %v341 = vrot.slane %v340, 2
      %v342 = vadd.f32 %v340, %v341
      %v343 = vrot.slane %v342, 1
      %v344 = vadd.f32 %v342, %v343
      %s345 = vtos %v344
      %v346 = vsel %vm330, %v325, 0.0
      %347 = vadd.xlane.f32.xlu0 %v346
      %v348 = vpop.xlane.xlu0 %347
      %v349 = vmul.f32 %v348, %v321
      %v350 = vsel %vm335, %v349, 0.0
      %351 = vadd.xlane.f32.xlu0 %v350
      %v352 = vpop.xlane.xlu0 %351
      %v353 = vrot.slane %v352, 4
      %v354 = vadd.f32 %v352, %v353
      %v355 = vrot.slane %v354, 2
      %v356 = vadd.f32 %v354, %v355
      %v357 = vrot.slane %v356, 1
      %v358 = vadd.f32 %v356, %v357
      %s359 = vtos %v358
      %v360 = vsel %vm330, %v329, 0.0
      %361 = vadd.xlane.f32.xlu0 %v360
      %v362 = vpop.xlane.xlu0 %361
      %v363 = vmul.f32 %v362, %v321
      %v364 = vsel %vm335, %v363, 0.0
      %365 = vadd.xlane.f32.xlu0 %v364
      %v366 = vpop.xlane.xlu0 %365
      %v367 = vrot.slane %v366, 4
      %v368 = vadd.f32 %v366, %v367
      %v369 = vrot.slane %v368, 2
      %v370 = vadd.f32 %v368, %v369
      %v371 = vrot.slane %v370, 1
      %v372 = vadd.f32 %v370, %v371
      %s373 = vtos %v372
      %v374 = vsel %vm335, %v321, 0.0
      %375 = vadd.xlane.f32.xlu0 %v374
      %v376 = vpop.xlane.xlu0 %375
      %v377 = vrot.slane %v376, 4
      %v378 = vadd.f32 %v376, %v377
      %v379 = vrot.slane %v378, 2
      %v380 = vadd.f32 %v378, %v379
      %v381 = vrot.slane %v380, 1
      %v382 = vadd.f32 %v380, %v381
      %s383 = vtos %v382
      %385 = vrot.lane.b32.xlu0 %v323, 1
      %v386 = vpop.permute.xlu0 %385
      %v388 = vsub.f32 %v323, %v386
      %v389 = vmul.f32 %v388, %v388
      %391 = vrot.lane.b32.xlu0 %v389, 127
      %v392 = vpop.permute.xlu0 %391
      %vm394 = vcmask 121856
      %v395 = vsel %vm394, %v392, 0.0
      %396 = vadd.xlane.f32.xlu0 %v395
      %v397 = vpop.xlane.xlu0 %396
      %v398 = vmul.f32 %v397, %v322
      %v399 = vsel %vm335, %v398, 0.0
      %400 = vadd.xlane.f32.xlu0 %v399
      %v401 = vpop.xlane.xlu0 %400
      %v402 = vrot.slane %v401, 4
      %v403 = vadd.f32 %v401, %v402
      %v404 = vrot.slane %v403, 2
      %v405 = vadd.f32 %v403, %v404
      %v406 = vrot.slane %v405, 1
      %v407 = vadd.f32 %v405, %v406
      %s408 = vtos %v407
      %v409 = vmul.f32 %v319, 2.0
      %411 = vrot.lane.b32.xlu0 %v409, 1
      %v412 = vpop.permute.xlu0 %411
      %v414 = vsub.f32 %v319, %v412
      %416 = vrot.lane.b32.xlu0 %v319, 2
      %v417 = vpop.permute.xlu0 %416
      %v419 = vadd.f32 %v414, %v417
      %v420 = vmul.f32 %v419, %v419
      %422 = vrot.lane.b32.xlu0 %v420, 126
      %v423 = vpop.permute.xlu0 %422
      %vm425 = vcmask 113664
      %v426 = vsel %vm425, %v423, 0.0
      %427 = vadd.xlane.f32.xlu0 %v426
      %v428 = vpop.xlane.xlu0 %427
      %v429 = vmul.f32 %v428, %v321
      %v430 = vsel %vm335, %v429, 0.0
      %431 = vadd.xlane.f32.xlu0 %v430
      %v432 = vpop.xlane.xlu0 %431
      %v433 = vrot.slane %v432, 4
      %v434 = vadd.f32 %v432, %v433
      %v435 = vrot.slane %v434, 2
      %v436 = vadd.f32 %v434, %v435
      %v437 = vrot.slane %v436, 1
      %v438 = vadd.f32 %v436, %v437
      %s439 = vtos %v438
      %v440 = vld [vmem:[%s5] sm:$0xff]
      %v441 = vld [vmem:[%s5 + $0x8] sm:$0xff]
      %v442 = vsel %vm330, %v319, 0
      %444 = vmatpush.msra.mxu0 0.0
      %445 = vmatpush.msra.mxu0 0.0
      %446 = vmatpush.msra.mxu0 0.0
      %447 = vmatpush.msra.mxu0 0.0
      %448 = vmatpush.msra.mxu0 0.0
      %449 = vmatpush.msra.mxu0 0.0
      %450 = vmatpush.msra.mxu0 0.0
      %451 = vmatpush.msra.mxu0 0.0
      %452 = vmatpush.msra.mxu0 0.0
      %453 = vmatpush.msra.mxu0 0.0
      %454 = vmatpush.msra.mxu0 0.0
      %455 = vmatpush.msra.mxu0 0.0
      %456 = vmatpush.msra.mxu0 0.0
      %457 = vmatpush.msra.mxu0 0.0
      %458 = vmatpush.msra.mxu0 %v441
      %459 = vmatpush.msra.mxu0 %v440
      %460 = vmatmul.f32.gmra.mxu0 %v442
      %v461 = vpop.f32.mrf.mxu0
      %v462 = vadd.f32 0.0, %v461
      %463 = vdwg.mxu0
      %v465 = vsel %vm330, %v320, 0
      %467 = vmatpush.msra.mxu0 0.0
      %468 = vmatpush.msra.mxu0 0.0
      %469 = vmatpush.msra.mxu0 0.0
      %470 = vmatpush.msra.mxu0 0.0
      %471 = vmatpush.msra.mxu0 0.0
      %472 = vmatpush.msra.mxu0 0.0
      %473 = vmatpush.msra.mxu0 0.0
      %474 = vmatpush.msra.mxu0 0.0
      %475 = vmatpush.msra.mxu0 0.0
      %476 = vmatpush.msra.mxu0 0.0
      %477 = vmatpush.msra.mxu0 0.0
      %478 = vmatpush.msra.mxu0 0.0
      %479 = vmatpush.msra.mxu0 0.0
      %480 = vmatpush.msra.mxu0 0.0
      %481 = vmatpush.msra.mxu0 %v441
      %482 = vmatpush.msra.mxu0 %v440
      %483 = vmatmul.f32.gmra.mxu0 %v465
      %v484 = vpop.f32.mrf.mxu0
      %v485 = vadd.f32 0.0, %v484
      %486 = vdwg.mxu0
      %v487 = vmul.f32 %v462, %v462
      %489 = vrot.lane.b32.xlu0 %v487, 119
      %v490 = vpop.permute.xlu0 %489
      %v492 = vadd.f32 %v487, %v490
      %v493 = vmul.f32 %v485, %v485
      %495 = vrot.lane.b32.xlu0 %v493, 119
      %v496 = vpop.permute.xlu0 %495
      %v498 = vadd.f32 %v493, %v496
      %v499 = vsub.f32 %v492, %v498
      %v500 = vlaneseq
      %v501 = vand.u32 %v500, 127
      %vm502 = vcmp.eq.s32.totalorder %v501, 0
      %v503 = vsel %vm502, 1.0, 2.0
      %vm504 = vcmp.eq.s32.totalorder %v501, 8
      %v505 = vsel %vm504, 1.0, %v503
      %v506 = vmul.f32 %v505, %v499
      %v507 = vmul.f32 %v506, %v499
      %vm508 = vcmask 72704
      %v509 = vsel %vm508, %v507, 0.0
      %510 = vadd.xlane.f32.xlu0 %v509
      %v511 = vpop.xlane.xlu0 %510
      %v512 = vmul.f32 %v511, %v322
      %v513 = vsel %vm335, %v512, 0.0
      %514 = vadd.xlane.f32.xlu0 %v513
      %v515 = vpop.xlane.xlu0 %514
      %v516 = vrot.slane %v515, 4
      %v517 = vadd.f32 %v515, %v516
      %v518 = vrot.slane %v517, 2
      %v519 = vadd.f32 %v517, %v518
      %v520 = vrot.slane %v519, 1
      %v521 = vadd.f32 %v519, %v520
      %s522 = vtos %v521
      %v523 = vlaneseq
      %v524 = vshrl.u32 %v523, 7
      %vm525 = vcmp.eq.s32.totalorder %v524, 0
      %v526 = vstv %s345
      %v527 = vsel %vm525, %v526, 0.0
      %vm528 = vcmp.eq.s32.totalorder %v524, 1
      %v529 = vstv %s359
      %v530 = vsel %vm528, %v529, %v527
      %vm531 = vcmp.eq.s32.totalorder %v524, 2
      %v532 = vstv %s373
      %v533 = vsel %vm531, %v532, %v530
      %vm534 = vcmp.eq.s32.totalorder %v524, 3
      %v535 = vstv %s408
      %v536 = vsel %vm534, %v535, %v533
      %vm537 = vcmp.eq.s32.totalorder %v524, 4
      %v538 = vstv %s439
      %v539 = vsel %vm537, %v538, %v536
      %vm540 = vcmp.eq.s32.totalorder %v524, 5
      %v541 = vstv %s522
      %v542 = vsel %vm540, %v541, %v539
      %vm543 = vcmp.eq.s32.totalorder %v524, 6
      %v544 = vstv %s383
      %v545 = vsel %vm543, %v544, %v542
      %v546 = vld [vmem:[%s313] sm:$0xff]
      %v547 = vadd.f32 %v546, %v545
      %548 = vst [vmem:[%s313] sm:$0xff] %v547
      %p549 = scmp.eq.s32.totalorder %s21, 0
      %p550 = pnand %p549, %p314
      %p551 = pneg %p550
      // Predicated region
      $region49: #{multitask_loss.1} parent=43 // pred_check
        _
      $region50: #{multitask_loss.1} parent=43 // pred_check_branch
        %553 = sbr.rel (%p550) target = $region52
      $region51: #{multitask_loss.1} parent=43 // pred_region
        %v554 = vld [vmem:[%s3] sm:$0x3]
        %v555 = vld [vmem:[%s4] sm:$0x3]
        %vm556 = vcmask 33792
        %v557 = vsel %vm556, %v554, -inf
        %558 = vmax.xlane.f32.xlu0 %v557
        %v559 = vpop.xlane.xlu0 %558
        %v560 = vsub.f32 %v554, %v559
        %v561 = vmul.f32 %v560, 1.442695
        %v562 = vpow.pop %v561
        %v563 = vsel %vm556, %v562, 0.0
        %564 = vadd.xlane.f32.xlu0 %v563
        %v565 = vpop.xlane.xlu0 %564
        %v566 = vlog2.pop %v565
        %v567 = vmul.f32 %v566, 0.6931472
        %v568 = vadd.f32 %v559, %v567
        %569 = vset.pattern.permute.xlu0 0
        %570 = vperm.xlu0 %569, %v555
        %v571 = vpop.permute.xlu0 %570
        %vm572 = vcmp.eq.s32.totalorder %v501, %v571
        %v573 = vsel %vm572, %v554, 0.0
        %v574 = vsel %vm556, %v573, 0.0
        %575 = vadd.xlane.f32.xlu0 %v574
        %v576 = vpop.xlane.xlu0 %575
        %v577 = vsub.f32 %v568, %v576
        %vm578 = vcmask 1024
        %v579 = vsel %vm578, %v577, 0.0
        %580 = vadd.xlane.f32.xlu0 %v579
        %v581 = vpop.xlane.xlu0 %580
        %v582 = vrot.slane %v581, 4
        %v583 = vadd.f32 %v581, %v582
        %v584 = vrot.slane %v583, 2
        %v585 = vadd.f32 %v583, %v584
        %v586 = vrot.slane %v585, 1
        %v587 = vadd.f32 %v585, %v586
        %s588 = vtos %v587
        %v589 = vld [vmem:[%s313] sm:$0xff]
        %vm590 = vcmp.eq.s32.totalorder %v524, 7
        %v591 = vstv %s588
        %v592 = vsel %vm590, %v591, 0.0
        %v593 = vadd.f32 %v589, %v592
        %594 = vst [vmem:[%s313] sm:$0xff] %v593
      $region52: #{multitask_loss.1} parent=43 // pred_fallthru
        _
      %p595 = scmp.lt.s32.totalorder %s21, 1
      %s596 = scalar_select %p595, %s21, 1
      %s597 = smul.addr %s596, 8
      %s598 = scalar_lea.vmem %s6, %s597
      // Predicated region
      $region53: #{multitask_loss.1} parent=43 // pred_check
        %p599 = pneg %p194
      $region54: #{multitask_loss.1} parent=43 // pred_check_branch
        %601 = sbr.rel (%p599) target = $region56
      $region55: #{multitask_loss.1} parent=43 // pred_region
        _
      $region56: #{multitask_loss.1} parent=43 // pred_fallthru
        _
    $region44: #{multitask_loss.1} parent=5 // pred_fallthru
      _
    %p602 = scmp.le.s32.totalorder 2, %s12
    // Predicated region
    $region57: #{multitask_loss.1} parent=5 // pred_check
      %p603 = pneg %p602
    $region58: #{multitask_loss.1} parent=5 // pred_check_branch
      %605 = sbr.rel (%p603) target = $region60
    $region59: #{multitask_loss.1} parent=5 // pred_region
      %s606 = ssub.s32 %s12, 2
      // Predicated region
      $region61: #{multitask_loss.1} parent=59 // pred_check
        %p607 = pneg %p200
      $region62: #{multitask_loss.1} parent=59 // pred_check_branch
        %609 = sbr.rel (%p607) target = $region64
      $region63: #{multitask_loss.1} parent=59 // pred_region
        %p610 = scmp.lt.s32.totalorder %s23, 1
        %s611 = scalar_select %p610, %s23, 1
        %s612 = smul.addr %s611, 8
        %s613 = scalar_lea.vmem %s6, %s612
      $region64: #{multitask_loss.1} parent=59 // pred_fallthru
        _
    $region60: #{multitask_loss.1} parent=5 // pred_fallthru
      _
  $region6: #{multitask_loss.1} parent=0 // loop_footer
    %s16 = sadd.s32 1, %s12
  $region7: #{multitask_loss.1} parent=0 // loop_footer_branch
    %11 = sbr.rel target = $region3
  $region8: #{multitask_loss.1} parent=0 // loop_exit
    _

</llo_original>
